<compile_context>
chip_gen: v7x
topology: tpu7x:2x2x1
jax: 0.10.0
libtpu: 0.0.40
codegen_flags: <defaults>
</compile_context>

<pallas_src>
import functools

import jax
import jax.numpy as jnp
from jax.experimental import pallas as pl
from jax.experimental.pallas import tpu as pltpu

_LANES = 128


def _mse_kernel(p_ref, g_ref, o_ref, acc_ref, *, n_true, tn, inv_n, ragged):
    # p_ref, g_ref: (4, 4, tn) VMEM tiles; o_ref: (1, 1) SMEM scalar slot;
    # acc_ref: (4, group) f32 resident partial sums (one vreg).
    i = pl.program_id(0)

    @pl.when(i == 0)
    def _init():
        acc_ref[...] = jnp.zeros_like(acc_ref)

    if tn >= _LANES:
        group, n_groups = _LANES, tn // _LANES
    else:  # tiny-N single-block case (block == full dim)
        group, n_groups = tn, 1

    if ragged:
        # Hoisted once per step (JAX does not CSE broadcasts inside loops).
        base_col = jax.lax.broadcasted_iota(jnp.int32, (4, 4, group), 2)
        block_off = i * tn

    # Chunked hot loop: 128-lane, lane-aligned static slices of the VMEM block
    # keep all f32 intermediates vreg-sized (no big VMEM temps / spills), and
    # every op below is VPU work; the only XLU reduce happens in _finalize.
    part = jnp.zeros((4, group), jnp.float32)
    for c in range(n_groups):
        lo = c * group
        p = p_ref[:, :, lo:lo + group].astype(jnp.float32)
        g = g_ref[:, :, lo:lo + group].astype(jnp.float32)
        d = p - g
        sq = d * d
        if ragged:
            # Mask lanes past the true N: Pallas pads the last partial block
            # with unspecified data; unmasked lanes would corrupt the sum.
            col = base_col + (block_off + lo)
            sq = jnp.where(col < n_true, sq, 0.0)
        part = part + jnp.sum(sq, axis=0)        # major-axis fold: vreg adds
    acc_ref[...] += part

    @pl.when(i == pl.num_programs(0) - 1)
    def _finalize():
        # Single cross-lane/sublane reduction + one multiply, once per call.
        o_ref[0, 0] = jnp.sum(acc_ref[...]) * inv_n


def supervised_loss(preds, gts, *, tile_n=16384):
    """MSE loss between predicted and ground-truth (4, 4, N) pose matrices.

    preds, gts: arrays of shape (4, 4, N) (convention from the module
    docstring), float32 or bfloat16.  Returns a scalar float32 loss.
    """
    assert preds.shape == gts.shape
    assert preds.shape[0] == 4 and preds.shape[1] == 4
    assert tile_n % _LANES == 0
    n = preds.shape[2]
    n_elem = 16 * n

    # Tile the N axis directly (no wrapper copy).  TN is a multiple of 128 and
    # <= N (so blocks never exceed the array); for N < 128 use a single block
    # equal to the full dim.  Any ragged tail is masked inside the kernel.
    if n < _LANES:
        tn = n
    else:
        tn = min(tile_n, (n // _LANES) * _LANES)
    num_blocks = -(-n // tn)                     # cdiv
    ragged = (num_blocks * tn != n)
    group = _LANES if tn >= _LANES else tn

    kernel = functools.partial(
        _mse_kernel, n_true=n, tn=tn, inv_n=float(1.0 / n_elem), ragged=ragged)

    out = pl.pallas_call(
        kernel,
        out_shape=jax.ShapeDtypeStruct((1, 1), jnp.float32),
        grid_spec=pltpu.PrefetchScalarGridSpec(
            num_scalar_prefetch=0,
            grid=(num_blocks,),
            in_specs=[
                pl.BlockSpec((4, 4, tn), lambda i: (0, 0, i)),
                pl.BlockSpec((4, 4, tn), lambda i: (0, 0, i)),
            ],
            out_specs=pl.BlockSpec(memory_space=pltpu.MemorySpace.SMEM),
            scratch_shapes=[pltpu.VMEM((4, group), jnp.float32)],
        ),
        compiler_params=pltpu.CompilerParams(
            dimension_semantics=("arbitrary",),   # reduction axis
            vmem_limit_bytes=32 * 1024 * 1024,    # safe headroom on v5e/v6e/v7x
        ),
    )(preds, gts)
    return out[0, 0]


if __name__ == "__main__":
    key = jax.random.PRNGKey(0)
    k1, k2 = jax.random.split(key)

    # Small case consistent with the module docstring (4x4xN pose matrices).
    n_seq = 8
    preds = jax.random.normal(k1, (4, 4, n_seq), dtype=jnp.float32)
    gts = jax.random.normal(k2, (4, 4, n_seq), dtype=jnp.float32)

    loss = jax.block_until_ready(jax.jit(supervised_loss)(preds, gts))

    # Pure-JAX reference check.
    ref = jnp.mean((preds - gts) ** 2)
    assert jnp.allclose(loss, ref, rtol=1e-5, atol=1e-6), (loss, ref)

    # Multi-block + ragged-tail case (exercises the in-kernel masking path).
    n_big = 20000  # -> TN=16384, 2 grid steps, 3616 masked tail lanes
    pb = jax.random.normal(k1, (4, 4, n_big), dtype=jnp.float32)
    gb = jax.random.normal(k2, (4, 4, n_big), dtype=jnp.float32)
    loss_big = jax.block_until_ready(jax.jit(supervised_loss)(pb, gb))
    ref_big = jnp.mean((pb - gb) ** 2)
    assert jnp.allclose(loss_big, ref_big, rtol=1e-4, atol=1e-5), (loss_big, ref_big)

    print("KERNEL_OK")
</pallas_src>

<mosaic_0001>
module attributes {stable_mosaic.version = 11 : i64} {
  func.func @_mse_kernel(%arg0: i32, %arg1: memref<4x4x8xf32, #tpu.memory_space<vmem>>, %arg2: memref<4x4x8xf32, #tpu.memory_space<vmem>>, %arg3: memref<1x1xf32, #tpu.memory_space<smem>>, %arg4: memref<4x8xf32, #tpu.memory_space<vmem>>) attributes {dimension_semantics = [#tpu.dimension_semantics<arbitrary>], iteration_bounds = array<i64: 1>, scalar_prefetch = 0 : i64, scratch_operands = 1 : i64, tpu.core_type = #tpu.core_type<tc>, window_params = [{transform_indices = @transform_0, window_bounds = array<i64: 4, 4, 8>}, {transform_indices = @transform_1, window_bounds = array<i64: 4, 4, 8>}, {transform_indices = @transform_2, window_bounds = array<i64: 1, 1>}]} {
    %c0_i32 = arith.constant 0 : i32
    %0 = arith.cmpi eq, %arg0, %c0_i32 : i32
    %1 = arith.extui %0 : i1 to i32
    %c0_i32_0 = arith.constant 0 : i32
    %2 = arith.cmpi ne, %1, %c0_i32_0 : i32
    scf.if %2 {
      %cst_13 = arith.constant 0.000000e+00 : f32
      %16 = vector.broadcast %cst_13 : f32 to vector<4x8xf32>
      %c0_14 = arith.constant 0 : index
      %c0_15 = arith.constant 0 : index
      %17 = vector.load %arg4[%c0_14, %c0_15] : memref<4x8xf32, #tpu.memory_space<vmem>>, vector<4x8xf32>
      tpu.vector_store %arg4[%c0_14, %c0_15], %16 {strides = array<i32>} : memref<4x8xf32, #tpu.memory_space<vmem>>, vector<4x8xf32>,
    } else {
    }
    %cst = arith.constant 0.000000e+00 : f32
    %3 = vector.broadcast %cst : f32 to vector<4x8xf32>
    %c0 = arith.constant 0 : index
    %c0_1 = arith.constant 0 : index
    %c0_2 = arith.constant 0 : index
    %4 = vector.load %arg1[%c0, %c0_1, %c0_2] : memref<4x4x8xf32, #tpu.memory_space<vmem>>, vector<4x4x8xf32>
    %c0_3 = arith.constant 0 : index
    %c0_4 = arith.constant 0 : index
    %c0_5 = arith.constant 0 : index
    %5 = vector.load %arg2[%c0_3, %c0_4, %c0_5] : memref<4x4x8xf32, #tpu.memory_space<vmem>>, vector<4x4x8xf32>
    %6 = arith.subf %4, %5 : vector<4x4x8xf32>
    %7 = arith.mulf %6, %6 : vector<4x4x8xf32>
    %cst_6 = arith.constant dense<0.000000e+00> : vector<4x8xf32>
    %8 = vector.multi_reduction <add>, %7, %cst_6 [0] : vector<4x4x8xf32> to vector<4x8xf32>
    %9 = arith.addf %3, %8 : vector<4x8xf32>
    %c0_7 = arith.constant 0 : index
    %c0_8 = arith.constant 0 : index
    %10 = vector.load %arg4[%c0_7, %c0_8] : memref<4x8xf32, #tpu.memory_space<vmem>>, vector<4x8xf32>
    %11 = arith.addf %10, %9 : vector<4x8xf32>
    %c0_9 = arith.constant 0 : index
    %c0_10 = arith.constant 0 : index
    %12 = vector.load %arg4[%c0_9, %c0_10] : memref<4x8xf32, #tpu.memory_space<vmem>>, vector<4x8xf32>
    tpu.vector_store %arg4[%c0_9, %c0_10], %11 {strides = array<i32>} : memref<4x8xf32, #tpu.memory_space<vmem>>, vector<4x8xf32>,
    %c0_i32_11 = arith.constant 0 : i32
    %13 = arith.cmpi eq, %arg0, %c0_i32_11 : i32
    %14 = arith.extui %13 : i1 to i32
    %c0_i32_12 = arith.constant 0 : i32
    %15 = arith.cmpi ne, %14, %c0_i32_12 : i32
    scf.if %15 {
      %c0_13 = arith.constant 0 : index
      %c0_14 = arith.constant 0 : index
      %16 = vector.load %arg4[%c0_13, %c0_14] : memref<4x8xf32, #tpu.memory_space<vmem>>, vector<4x8xf32>
      %17 = vector.shape_cast %16 : vector<4x8xf32> to vector<1x4x8xf32>
      %cst_15 = arith.constant dense<0.000000e+00> : vector<1xf32>
      %18 = vector.multi_reduction <add>, %17, %cst_15 [1, 2] : vector<1x4x8xf32> to vector<1xf32>
      %19 = vector.shape_cast %18 : vector<1xf32> to vector<1x1x1xf32>
      %20 = vector.extract %19[0, 0, 0] : f32 from vector<1x1x1xf32>
      %cst_16 = arith.constant 7.812500e-03 : f32
      %21 = arith.mulf %20, %cst_16 : f32
      %c0_17 = arith.constant 0 : index
      %c0_18 = arith.constant 0 : index
      %22 = memref.load %arg3[%c0_17, %c0_18] : memref<1x1xf32, #tpu.memory_space<smem>>
      memref.store %21, %arg3[%c0_17, %c0_18] : memref<1x1xf32, #tpu.memory_space<smem>>
    } else {
    }
    return
  }
  func.func @transform_0(%arg0: i32) -> (i32, i32, i32) {
    %c0_i32 = arith.constant 0 : i32
    %c0_i32_0 = arith.constant 0 : i32
    %c0_i32_1 = arith.constant 0 : i32
    return %c0_i32, %c0_i32_0, %arg0 : i32, i32, i32
  }
  func.func @transform_1(%arg0: i32) -> (i32, i32, i32) {
    %c0_i32 = arith.constant 0 : i32
    %c0_i32_0 = arith.constant 0 : i32
    %c0_i32_1 = arith.constant 0 : i32
    return %c0_i32, %c0_i32_0, %arg0 : i32, i32, i32
  }
  func.func @transform_2(%arg0: i32) -> (i32, i32) {
    %c0_i32 = arith.constant 0 : i32
    %c0_i32_0 = arith.constant 0 : i32
    %c0_i32_1 = arith.constant 0 : i32
    return %c0_i32, %c0_i32_0 : i32, i32
  }
}

</mosaic_0001>

<llo_original>
// kernel: supervised_loss.1
$region0: #{supervised_loss.1}
  #allocation0 [shape = 'u32[]', space=smem, size = 0x4, offset = 0x4, fixed_abs, tag = 'smem constant byte address 0x4 - core index']
  #allocation1 [shape = 'u32[144,128]{1,0:T(1,128)}', space=vmem, size = 0x12000, scoped, tag = 'internal scratch']
  #allocation2 [shape = 'f32[4,8]{1,0:T(4,128)}', space=vmem, size = 0x800, scoped, tag = 'scratch operand']
  %s0 = inlined_call_operand.hbm [shape: f32[4,4,8], index: 0, kind: input, shape index: {}]
  %s1 = inlined_call_operand.hbm [shape: f32[4,4,8], index: 1, kind: input, shape index: {}]
  %s2 = inlined_call_operand.hbm [shape: f32[1,1], index: 2, kind: output, shape index: {}]
  %s3 = sld [smem:[#allocation0]]
  $region34: #{supervised_loss.1} parent=0
    _
  %s5 = ssub.s32 1, %s3
  %s6 = scalar_select 0, %s5, %s3
  $region1: #{supervised_loss.1} parent=0
    #allocation3 [shape = 'u8[8192]{0}', space=vmem, size = 0x2000, scoped, tag = 'input window, operand 0, single buffered']
    #allocation4 [shape = 's32[1]{0}', space=sflag, size = 0x4, scoped, tag = 'scoped memory for supervised_loss.1']
    #allocation5 [shape = 's32[1]{0}', space=sflag, size = 0x4, scoped, tag = 'scoped memory for supervised_loss.1']
    #allocation6 [shape = 'u8[8192]{0}', space=vmem, size = 0x2000, scoped, tag = 'input window, operand 1, single buffered']
    #allocation7 [shape = 's32[1]{0}', space=sflag, size = 0x4, scoped, tag = 'scoped memory for supervised_loss.1']
    #allocation8 [shape = 'u8[512]{0}', space=smem, size = 0x200, scoped, tag = 'output window, operand 0, single buffered']
    %7 = vsyncpa [#allocation4], 0
    %8 = vsyncpa [#allocation7], 0
    %9 = vsyncpa [#allocation5], 0
    // Predicated region
    $region2: #{supervised_loss.1} parent=1 // pred_check
      _
    $region3: #{supervised_loss.1} parent=1 // pred_check_branch
      %11 = sbr.rel (0) target = $region5
    $region4: #{supervised_loss.1} parent=1 // pred_region
      %s13 = ssub.s32 256, 256
      %14 = vsyncadd [#allocation4], %s13
      %s15 = sshll.u32 [#allocation3], 4
      %s16 = int_to_ptr.vmem [resolvable:$true] %s15
      %21 = dma.hbm_to_vmem [thread:$0]  %s0, 256, %s16, [#allocation4], 64, 64, 4
    $region5: #{supervised_loss.1} parent=1 // pred_fallthru
      _
    // Predicated region
    $region6: #{supervised_loss.1} parent=1 // pred_check
      _
    $region7: #{supervised_loss.1} parent=1 // pred_check_branch
      %23 = sbr.rel (0) target = $region9
    $region8: #{supervised_loss.1} parent=1 // pred_region
      %s25 = ssub.s32 256, 256
      %26 = vsyncadd [#allocation7], %s25
      %s27 = sshll.u32 [#allocation6], 4
      %s28 = int_to_ptr.vmem [resolvable:$true] %s27
      %33 = dma.hbm_to_vmem [thread:$0]  %s1, 256, %s28, [#allocation7], 64, 64, 4
    $region9: #{supervised_loss.1} parent=1 // pred_fallthru
      _
    // Predicated region
    $region10: #{supervised_loss.1} parent=1 // pred_check
      _
    $region11: #{supervised_loss.1} parent=1 // pred_check_branch
      %35 = sbr.rel (0) target = $region13
    $region12: #{supervised_loss.1} parent=1 // pred_region
      %36 = dma.done [#allocation4], 256
    $region13: #{supervised_loss.1} parent=1 // pred_fallthru
      _
    // Predicated region
    $region14: #{supervised_loss.1} parent=1 // pred_check
      _
    $region15: #{supervised_loss.1} parent=1 // pred_check_branch
      %38 = sbr.rel (0) target = $region17
    $region16: #{supervised_loss.1} parent=1 // pred_region
      %39 = dma.done [#allocation7], 256
    $region17: #{supervised_loss.1} parent=1 // pred_fallthru
      _
    %p40 = scmp.eq.s32.totalorder 0, 0
    // Predicated region
    $region18: #{supervised_loss.1} parent=1 // pred_check
      %p41 = pneg %p40
    $region19: #{supervised_loss.1} parent=1 // pred_check_branch
      %43 = sbr.rel (%p41) target = $region21
    $region20: #{supervised_loss.1} parent=1 // pred_region
      %vm44 = vcmask 60416
      %45 = vst.msk [vmem:[#allocation2] sm:$0xf] %vm44, 0.0
    $region21: #{supervised_loss.1} parent=1 // pred_fallthru
      _
    %v46 = vld [vmem:[#allocation3] sm:$0xf]
    %v47 = vld [vmem:[#allocation3 + $0x4] sm:$0xf]
    %v48 = vld [vmem:[#allocation3 + $0x8] sm:$0xf]
    %v49 = vld [vmem:[#allocation3 + $0xc] sm:$0xf]
    %v50 = vld [vmem:[#allocation6] sm:$0xf]
    %v51 = vld [vmem:[#allocation6 + $0x4] sm:$0xf]
    %v52 = vld [vmem:[#allocation6 + $0x8] sm:$0xf]
    %v53 = vld [vmem:[#allocation6 + $0xc] sm:$0xf]
    %v54 = vsub.f32 %v46, %v50
    %v55 = vsub.f32 %v47, %v51
    %v56 = vsub.f32 %v48, %v52
    %v57 = vsub.f32 %v49, %v53
    %v58 = vmul.f32 %v54, %v54
    %v59 = vmul.f32 %v55, %v55
    %v60 = vmul.f32 %v56, %v56
    %v61 = vmul.f32 %v57, %v57
    %vm62 = vcmask 60416
    %v63 = vsel %vm62, %v58, 0.0
    %v64 = vsel %vm62, %v59, 0.0
    %v65 = vadd.f32 %v63, %v64
    %v66 = vsel %vm62, %v60, 0.0
    %v67 = vadd.f32 %v65, %v66
    %v68 = vsel %vm62, %v61, 0.0
    %v69 = vadd.f32 %v67, %v68
    %v70 = vadd.f32 %v69, 0.0
    %v71 = vld [vmem:[#allocation2] sm:$0xf]
    %v72 = vadd.f32 %v71, %v70
    %73 = vst.msk [vmem:[#allocation2] sm:$0xf] %vm62, %v72
    // Predicated region
    $region22: #{supervised_loss.1} parent=1 // pred_check
      %p74 = pneg %p40
    $region23: #{supervised_loss.1} parent=1 // pred_check_branch
      %76 = sbr.rel (%p74) target = $region25
    $region24: #{supervised_loss.1} parent=1 // pred_region
      %v77 = vld [vmem:[#allocation2] sm:$0xf]
      %v78 = vsel %vm62, %v77, 0.0
      %79 = vadd.xlane.f32.xlu0 %v78
      %v80 = vpop.xlane.xlu0 %79
      %v81 = vrot.slane %v80, 4
      %v82 = vadd.f32 %v80, %v81
      %v83 = vrot.slane %v82, 2
      %v84 = vadd.f32 %v82, %v83
      %v85 = vrot.slane %v84, 1
      %v86 = vadd.f32 %v84, %v85
      %s87 = vtos %v86
      %s88 = smul.f32 %s87, 0.0078125
      %s89 = scalar_lea.smem [#allocation8], 0
      %90 = sst [smem:[%s89]] %s88
    $region25: #{supervised_loss.1} parent=1 // pred_fallthru
      _
    // Predicated region
    $region26: #{supervised_loss.1} parent=1 // pred_check
      _
    $region27: #{supervised_loss.1} parent=1 // pred_check_branch
      %92 = sbr.rel (0) target = $region29
    $region28: #{supervised_loss.1} parent=1 // pred_region
      %s94 = ssub.s32 16, 16
      %95 = vsyncadd [#allocation5], %s94
      %98 = dma.smem_to_hbm [#allocation8], 16, %s2, [#allocation5]
    $region29: #{supervised_loss.1} parent=1 // pred_fallthru
      _
    // Predicated region
    $region30: #{supervised_loss.1} parent=1 // pred_check
      _
    $region31: #{supervised_loss.1} parent=1 // pred_check_branch
      %100 = sbr.rel (0) target = $region33
    $region32: #{supervised_loss.1} parent=1 // pred_region
      %101 = dma.done [#allocation5], 16
    $region33: #{supervised_loss.1} parent=1 // pred_fallthru
      _
    %102 = sfence
    %103 = vsyncpa [#allocation4], 1
    %104 = vsyncpa [#allocation7], 1
    %105 = vsyncpa [#allocation5], 1

</llo_original>
